<compile_context>
chip_gen: v6e
topology: v6e:2x2x1
jax: 0.10.0
libtpu: 0.0.40
codegen_flags: <defaults>
</compile_context>

<pallas_src>
import functools
from typing import NamedTuple

import jax
import jax.numpy as jnp
from jax import lax
from jax.experimental import pallas as pl
from jax.experimental.pallas import tpu as pltpu


def _round_up(n, m):
    return ((n + m - 1) // m) * m


class PackedODEParams(NamedTuple):
    slab: jax.Array   # (DP + HP + 8, max(DP, HP)) zero-padded parameter slab
    d: int            # true feature dim
    h: int            # true hidden dim
    dp: int           # padded feature dim (multiple of 128, >= d + 1)
    hp: int           # padded hidden dim  (multiple of 128)


def pack_odefunc_params(w1, b1, w2, b2, dtype=None):
    """Pack Linear(D,H) -> Tanh -> Linear(H,D) params into one lane-dense slab.

    b1 is folded into an extra "bias row" of w1 (row index D); the padded state
    carries a constant 1.0 in lane D, so the first matmul absorbs b1 on the MXU.

    Row layout (zero padded, (8,128)-tile aligned):
      rows [0 : D)      lanes [0:H) -> w1  (D, H)
      row   D           lanes [0:H) -> b1  (folded bias row)
      rows [DP : DP+H)  lanes [0:D) -> w2  (H, D)
      row   DP+HP       lanes [0:D) -> b2

    dtype=jnp.bfloat16 (with a bf16 state) selects the MXU/HBM fast path on
    v5e/v6e/v7x; default f32 keeps exact parity with the PyTorch reference.
    """
    d, h = w1.shape
    assert w2.shape == (h, d) and b1.shape == (h,) and b2.shape == (d,)
    dtype = dtype or w1.dtype
    dp = _round_up(d + 1, 128)       # +1 reserves the bias lane / bias row
    hp = _round_up(h, 128)
    lanes = max(dp, hp)
    rows = dp + hp + 8               # one 8-row band for b2
    slab = jnp.zeros((rows, lanes), dtype)
    slab = slab.at[0:d, 0:h].set(w1.astype(dtype))
    slab = slab.at[d, 0:h].set(b1.astype(dtype))          # folded b1
    slab = slab.at[dp:dp + h, 0:d].set(w2.astype(dtype))
    slab = slab.at[dp + hp, 0:d].set(b2.astype(dtype))
    return PackedODEParams(slab=slab, d=d, h=h, dp=dp, hp=hp)


def pad_state(y, params: PackedODEParams, bp=None):
    """Zero-pad (B, D) -> lane-dense (BP, DP); lane D is the constant-1 bias lane.

    Keep the state in this layout across all RHS calls of a solve (pad once
    before integration, slice once after) to avoid per-call HBM round trips.
    """
    b, d = y.shape
    assert d == params.d
    bp = _round_up(b, 8) if bp is None else bp
    y_pad = jnp.zeros((bp, params.dp), y.dtype)
    y_pad = y_pad.at[:b, :d].set(y)
    y_pad = y_pad.at[:b, d].set(jnp.ones((b,), y.dtype))   # bias lane -> folds b1
    return y_pad


def unpad_state(y_pad, params: PackedODEParams, b):
    return y_pad[:b, :params.d]


# --------------------------------------------------------------------------- #
# Kernels
# --------------------------------------------------------------------------- #
def _rhs(y, w1, w2, b2):
    # b1 is absorbed by the bias lane/row, so no broadcast add for it.
    h = jnp.tanh(jnp.dot(y, w1, preferred_element_type=jnp.float32))     # MXU+EUP
    return jnp.dot(h.astype(w2.dtype), w2,
                   preferred_element_type=jnp.float32) + b2              # MXU+VPU


def _odefunc_kernel(y_ref, p_ref, o_ref, *, dp, hp):
    # Static, tile-aligned views into the resident parameter slab (no extra DMA).
    w1 = p_ref[0:dp, 0:hp]                      # (DP, HP), includes b1 bias row
    w2 = p_ref[dp:dp + hp, 0:dp]                # (HP, DP)
    b2 = p_ref[dp + hp:dp + hp + 1, 0:dp]       # (1, DP)
    o_ref[...] = _rhs(y_ref[...].astype(jnp.float32), w1, w2, b2).astype(o_ref.dtype)


def _odefunc_euler_kernel(y_ref, p_ref, o_ref, *, dp, hp, steps, dt):
    # Weights loaded ONCE above the solver loop (loop-invariant vregs); the state
    # stays VMEM/vreg resident across all steps -> one launch per trajectory tile.
    w1 = p_ref[0:dp, 0:hp]
    w2 = p_ref[dp:dp + hp, 0:dp]
    y0 = y_ref[...].astype(jnp.float32)
    b2 = jnp.broadcast_to(p_ref[dp + hp:dp + hp + 1, 0:dp], y0.shape)  # hoisted
    dt_f = jnp.float32(dt)

    def body(_, y):
        # Bias lane (column D) stays 1.0: rhs is identically 0 there.
        return y + dt_f * _rhs(y, w1, w2, b2)

    y = lax.fori_loop(0, steps, body, y0, unroll=steps <= 8)
    o_ref[...] = y.astype(o_ref.dtype)


# --------------------------------------------------------------------------- #
# Wrappers
# --------------------------------------------------------------------------- #
def _pick_tb(bp, block_b):
    """Largest sublane-aligned batch tile <= block_b that divides BP, with >= 2
    grid tiles whenever BP >= 16 (so v7x megacore shards both TensorCores)."""
    cap = min(block_b, bp)
    if bp >= 16:
        cap = min(cap, bp // 2)
    cap = max(8, cap - cap % 8)
    tb = cap
    while bp % tb:
        tb -= 8
    return tb


def _call(kernel, y_pad, params: PackedODEParams, tb):
    bp, dp = y_pad.shape
    return pl.pallas_call(
        kernel,
        out_shape=jax.ShapeDtypeStruct((bp, dp), y_pad.dtype),
        grid_spec=pltpu.PrefetchScalarGridSpec(
            num_scalar_prefetch=0,
            grid=(bp // tb,),
            in_specs=[
                pl.BlockSpec((tb, dp), lambda i: (i, 0)),            # state tile
                # Constant index_map -> slab fetched once, VMEM-resident.
                # (Slab is ~135 KB; Buffered(1) pinning not worth the risk here.)
                pl.BlockSpec(params.slab.shape, lambda i: (0, 0)),
            ],
            out_specs=pl.BlockSpec((tb, dp), lambda i: (i, 0)),      # lane-dense store
        ),
        compiler_params=pltpu.CompilerParams(
            dimension_semantics=("parallel",)),   # shard batch tiles across TCs
    )(y_pad, params.slab)


def odefunc_forward_padded(y_pad, params: PackedODEParams, *, block_b=512):
    """dy/dt = net(y) entirely in the padded (BP, DP) layout (no pad/unpad)."""
    bp, dp = y_pad.shape
    assert dp == params.dp and bp % 8 == 0
    tb = _pick_tb(bp, block_b)
    kernel = functools.partial(_odefunc_kernel, dp=params.dp, hp=params.hp)
    return _call(kernel, y_pad, params, tb)


def odefunc_forward(t, y, params: PackedODEParams, *, block_b=512):
    """Pallas equivalent of ODEFunc.forward(t, y) = net(y). `t` is unused."""
    del t  # ODEFunc ignores the time argument.
    b, d = y.shape
    assert d == params.d
    y_pad = pad_state(y, params)
    out_pad = odefunc_forward_padded(y_pad, params, block_b=block_b)
    return unpad_state(out_pad, params, b)


def odefunc_integrate_euler(y0, params: PackedODEParams, *, dt, steps, block_b=512):
    """Fused solver: `steps` explicit-Euler updates of dy/dt = net(y) in ONE
    pallas_call — amortizes launch/DMA overhead over the whole trajectory."""
    b, d = y0.shape
    assert d == params.d
    y_pad = pad_state(y0, params)
    tb = _pick_tb(y_pad.shape[0], block_b)
    kernel = functools.partial(_odefunc_euler_kernel, dp=params.dp, hp=params.hp,
                               steps=int(steps), dt=float(dt))
    out_pad = _call(kernel, y_pad, params, tb)
    return unpad_state(out_pad, params, b)


def init_odefunc_params(key, input_dim, hidden=50, dtype=jnp.float32):
    """Deterministic init mirroring nn.Linear defaults (U(-1/sqrt(fan_in), +))."""
    k1, k2, k3, k4 = jax.random.split(key, 4)
    bound1 = 1.0 / jnp.sqrt(input_dim)
    bound2 = 1.0 / jnp.sqrt(hidden)
    # Stored as (in, out) — transpose of PyTorch's (out, in) weight layout.
    w1 = jax.random.uniform(k1, (input_dim, hidden), dtype, -bound1, bound1)
    b1 = jax.random.uniform(k2, (hidden,), dtype, -bound1, bound1)
    w2 = jax.random.uniform(k3, (hidden, input_dim), dtype, -bound2, bound2)
    b2 = jax.random.uniform(k4, (input_dim,), dtype, -bound2, bound2)
    return w1, b1, w2, b2


if __name__ == "__main__":
    input_dim = 16
    hidden = 50

    key = jax.random.PRNGKey(0)
    kp, ky1, ky2 = jax.random.split(key, 3)
    w1, b1, w2, b2 = init_odefunc_params(kp, input_dim, hidden)
    params = pack_odefunc_params(w1, b1, w2, b2)   # f32 slab: exact-parity path

    def ref_rhs(y):
        return jnp.tanh(y @ w1 + b1) @ w2 + b2

    t = jnp.float32(0.0)  # unused; interface parity with forward(t, y)

    # 1) Single RHS evaluation (== ODEFunc.forward), small batch.
    y_small = jax.random.normal(ky1, (8, input_dim), dtype=jnp.float32)
    out = jax.block_until_ready(odefunc_forward(t, y_small, params))
    assert out.shape == y_small.shape
    assert jnp.allclose(out, ref_rhs(y_small), atol=1e-5, rtol=1e-5)

    # 2) Multi-tile batch (exercises the parallel grid / megacore split path).
    y_big = jax.random.normal(ky2, (256, input_dim), dtype=jnp.float32)
    out_big = jax.block_until_ready(odefunc_forward(t, y_big, params))
    assert jnp.allclose(out_big, ref_rhs(y_big), atol=1e-5, rtol=1e-5)

    # 3) Fused explicit-Euler trajectory: one launch for all solver steps.
    steps, dt = 8, 0.05
    y_traj = jax.block_until_ready(
        odefunc_integrate_euler(y_small, params, dt=dt, steps=steps))
    y_ref = y_small
    for _ in range(steps):
        y_ref = y_ref + dt * ref_rhs(y_ref)
    assert y_traj.shape == y_small.shape
    assert jnp.allclose(y_traj, y_ref, atol=1e-4, rtol=1e-4)

    print("KERNEL_OK")
</pallas_src>

<mosaic_0001>
module attributes {stable_mosaic.version = 11 : i64} {
  func.func @_odefunc_kernel(%arg0: i32, %arg1: memref<8x128xf32, #tpu.memory_space<vmem>>, %arg2: memref<264x128xf32, #tpu.memory_space<vmem>>, %arg3: memref<8x128xf32, #tpu.memory_space<vmem>>) attributes {dimension_semantics = [#tpu.dimension_semantics<parallel>], iteration_bounds = array<i64: 1>, scalar_prefetch = 0 : i64, scratch_operands = 0 : i64, tpu.core_type = #tpu.core_type<tc>, window_params = [{transform_indices = @transform_0, window_bounds = array<i64: 8, 128>}, {pipeline_mode = #tpu.pipeline_mode<synchronous>, transform_indices = @transform_1, window_bounds = array<i64: 264, 128>}, {transform_indices = @transform_2, window_bounds = array<i64: 8, 128>}]} {
    %c0 = arith.constant 0 : index
    %c0_0 = arith.constant 0 : index
    %0 = vector.load %arg2[%c0, %c0_0] : memref<264x128xf32, #tpu.memory_space<vmem>>, vector<128x128xf32>
    %c128 = arith.constant 128 : index
    %c0_1 = arith.constant 0 : index
    %1 = vector.load %arg2[%c128, %c0_1] : memref<264x128xf32, #tpu.memory_space<vmem>>, vector<128x128xf32>
    %c256 = arith.constant 256 : index
    %c0_2 = arith.constant 0 : index
    %2 = vector.load %arg2[%c256, %c0_2] : memref<264x128xf32, #tpu.memory_space<vmem>>, vector<1x128xf32>
    %c0_3 = arith.constant 0 : index
    %c0_4 = arith.constant 0 : index
    %3 = vector.load %arg1[%c0_3, %c0_4] : memref<8x128xf32, #tpu.memory_space<vmem>>, vector<8x128xf32>
    %cst = arith.constant dense<0.000000e+00> : vector<8x128xf32>
    %4 = tpu.matmul %3, %0, %cst {dimension_numbers = #tpu.dot_dimension_numbers<[1], [0], [0], [1], [0, 0, 1, 1], [], []>} : vector<8x128xf32>, vector<128x128xf32>, vector<8x128xf32> -> vector<8x128xf32>
    %5 = math.tanh %4 : vector<8x128xf32>
    %cst_5 = arith.constant dense<0.000000e+00> : vector<8x128xf32>
    %6 = tpu.matmul %5, %1, %cst_5 {dimension_numbers = #tpu.dot_dimension_numbers<[1], [0], [0], [1], [0, 0, 1, 1], [], []>} : vector<8x128xf32>, vector<128x128xf32>, vector<8x128xf32> -> vector<8x128xf32>
    %7 = vector.broadcast %2 : vector<1x128xf32> to vector<8x128xf32>
    %8 = arith.addf %6, %7 : vector<8x128xf32>
    %c0_6 = arith.constant 0 : index
    %c0_7 = arith.constant 0 : index
    %9 = vector.load %arg3[%c0_6, %c0_7] : memref<8x128xf32, #tpu.memory_space<vmem>>, vector<8x128xf32>
    tpu.vector_store %arg3[%c0_6, %c0_7], %8 {strides = array<i32>} : memref<8x128xf32, #tpu.memory_space<vmem>>, vector<8x128xf32>,
    return
  }
  func.func @transform_0(%arg0: i32) -> (i32, i32) {
    %c0_i32 = arith.constant 0 : i32
    %c0_i32_0 = arith.constant 0 : i32
    return %arg0, %c0_i32 : i32, i32
  }
  func.func @transform_1(%arg0: i32) -> (i32, i32) {
    %c0_i32 = arith.constant 0 : i32
    %c0_i32_0 = arith.constant 0 : i32
    %c0_i32_1 = arith.constant 0 : i32
    return %c0_i32, %c0_i32_0 : i32, i32
  }
  func.func @transform_2(%arg0: i32) -> (i32, i32) {
    %c0_i32 = arith.constant 0 : i32
    %c0_i32_0 = arith.constant 0 : i32
    return %arg0, %c0_i32 : i32, i32
  }
}

</mosaic_0001>

<llo_original>
// kernel: tpu_custom_call.1
$region0: #{tpu_custom_call.1}
  #allocation0 [shape = 'u32[]', space=smem, size = 0x4, offset = 0x4, fixed_abs, tag = 'smem constant byte address 0x4 - core index']
  #allocation1 [shape = 'u32[144,128]{1,0:T(1,128)}', space=vmem, size = 0x12000, scoped, tag = 'internal scratch']
  %s0 = inlined_call_operand.hbm [shape: f32[8,128], index: 0, kind: input, shape index: {}]
  %s1 = inlined_call_operand.hbm [shape: f32[264,128], index: 1, kind: input, shape index: {}]
  %s2 = inlined_call_operand.hbm [shape: f32[8,128], index: 2, kind: output, shape index: {}]
  %s3 = sld [smem:[#allocation0]]
  $region26: #{tpu_custom_call.1} parent=0
    _
  %s5 = ssub.s32 1, %s3
  %s6 = scalar_select 0, %s5, %s3
  $region1: #{tpu_custom_call.1} parent=0
    #allocation2 [shape = 'u8[4096]{0}', space=vmem, size = 0x1000, scoped, tag = 'input window, operand 0, single buffered']
    #allocation3 [shape = 's32[1]{0}', space=sflag, size = 0x4, scoped, tag = 'scoped memory for tpu_custom_call.1']
    #allocation4 [shape = 's32[1]{0}', space=sflag, size = 0x4, scoped, tag = 'scoped memory for tpu_custom_call.1']
    #allocation5 [shape = 'u8[135168]{0}', space=vmem, size = 0x21000, scoped, tag = 'input window, operand 1, single buffered']
    #allocation6 [shape = 's32[1]{0}', space=sflag, size = 0x4, scoped, tag = 'scoped memory for tpu_custom_call.1']
    #allocation7 [shape = 'u8[4096]{0}', space=vmem, size = 0x1000, scoped, tag = 'output window, operand 0, single buffered']
    %7 = vsyncpa [#allocation3], 0
    %8 = vsyncpa [#allocation6], 0
    %9 = vsyncpa [#allocation4], 0
    // Predicated region
    $region2: #{tpu_custom_call.1} parent=1 // pred_check
      _
    $region3: #{tpu_custom_call.1} parent=1 // pred_check_branch
      %11 = sbr.rel (0) target = $region5
    $region4: #{tpu_custom_call.1} parent=1 // pred_region
      %s13 = ssub.s32 128, 128
      %14 = vsyncadd [#allocation3], %s13
      %s16 = sshll.u32 [#allocation2], 4
      %s17 = int_to_ptr.vmem [resolvable:$true] %s16
      %19 = dma.hbm_to_vmem [thread:$0]  %s0, 128, %s17, [#allocation3]
    $region5: #{tpu_custom_call.1} parent=1 // pred_fallthru
      _
    // Predicated region
    $region6: #{tpu_custom_call.1} parent=1 // pred_check
      _
    $region7: #{tpu_custom_call.1} parent=1 // pred_check_branch
      %21 = sbr.rel (0) target = $region9
    $region8: #{tpu_custom_call.1} parent=1 // pred_region
      %s23 = ssub.s32 4224, 4224
      %24 = vsyncadd [#allocation6], %s23
      %s25 = sshll.u32 [#allocation5], 4
      %s26 = int_to_ptr.vmem [resolvable:$true] %s25
      %31 = dma.hbm_to_vmem [thread:$0]  %s1, 4224, %s26, [#allocation6], 128, 128, 8
    $region9: #{tpu_custom_call.1} parent=1 // pred_fallthru
      _
    // Predicated region
    $region10: #{tpu_custom_call.1} parent=1 // pred_check
      _
    $region11: #{tpu_custom_call.1} parent=1 // pred_check_branch
      %33 = sbr.rel (0) target = $region13
    $region12: #{tpu_custom_call.1} parent=1 // pred_region
      %34 = dma.done [#allocation3], 128
    $region13: #{tpu_custom_call.1} parent=1 // pred_fallthru
      _
    // Predicated region
    $region14: #{tpu_custom_call.1} parent=1 // pred_check
      _
    $region15: #{tpu_custom_call.1} parent=1 // pred_check_branch
      %36 = sbr.rel (0) target = $region17
    $region16: #{tpu_custom_call.1} parent=1 // pred_region
      %37 = dma.done [#allocation6], 4224
    $region17: #{tpu_custom_call.1} parent=1 // pred_fallthru
      _
    %v38 = vld [vmem:[#allocation5] sm:$0xff]
    %v39 = vld [vmem:[#allocation5 + $0x8] sm:$0xff]
    %v40 = vld [vmem:[#allocation5 + $0x10] sm:$0xff]
    %v41 = vld [vmem:[#allocation5 + $0x18] sm:$0xff]
    %v42 = vld [vmem:[#allocation5 + $0x20] sm:$0xff]
    %v43 = vld [vmem:[#allocation5 + $0x28] sm:$0xff]
    %v44 = vld [vmem:[#allocation5 + $0x30] sm:$0xff]
    %v45 = vld [vmem:[#allocation5 + $0x38] sm:$0xff]
    %v46 = vld [vmem:[#allocation5 + $0x40] sm:$0xff]
    %v47 = vld [vmem:[#allocation5 + $0x48] sm:$0xff]
    %v48 = vld [vmem:[#allocation5 + $0x50] sm:$0xff]
    %v49 = vld [vmem:[#allocation5 + $0x58] sm:$0xff]
    %v50 = vld [vmem:[#allocation5 + $0x60] sm:$0xff]
    %v51 = vld [vmem:[#allocation5 + $0x68] sm:$0xff]
    %v52 = vld [vmem:[#allocation5 + $0x70] sm:$0xff]
    %v53 = vld [vmem:[#allocation5 + $0x78] sm:$0xff]
    %v54 = vld [vmem:[#allocation5 + $0x80] sm:$0xff]
    %v55 = vld [vmem:[#allocation5 + $0x88] sm:$0xff]
    %v56 = vld [vmem:[#allocation5 + $0x90] sm:$0xff]
    %v57 = vld [vmem:[#allocation5 + $0x98] sm:$0xff]
    %v58 = vld [vmem:[#allocation5 + $0xa0] sm:$0xff]
    %v59 = vld [vmem:[#allocation5 + $0xa8] sm:$0xff]
    %v60 = vld [vmem:[#allocation5 + $0xb0] sm:$0xff]
    %v61 = vld [vmem:[#allocation5 + $0xb8] sm:$0xff]
    %v62 = vld [vmem:[#allocation5 + $0xc0] sm:$0xff]
    %v63 = vld [vmem:[#allocation5 + $0xc8] sm:$0xff]
    %v64 = vld [vmem:[#allocation5 + $0xd0] sm:$0xff]
    %v65 = vld [vmem:[#allocation5 + $0xd8] sm:$0xff]
    %v66 = vld [vmem:[#allocation5 + $0xe0] sm:$0xff]
    %v67 = vld [vmem:[#allocation5 + $0xe8] sm:$0xff]
    %v68 = vld [vmem:[#allocation5 + $0xf0] sm:$0xff]
    %v69 = vld [vmem:[#allocation5 + $0xf8] sm:$0xff]
    %v70 = vld [vmem:[#allocation5 + $0x100] sm:$0x1]
    %v71 = vld [vmem:[#allocation2] sm:$0xff]
    %72 = vmatprep.subr.mxu0 0.0
    %73 = vmatpush1.msra.mxu0 %v53
    %74 = vmatprep.subr.mxu0 0.0
    %75 = vmatpush1.msra.mxu0 %v52
    %76 = vmatprep.subr.mxu0 0.0
    %77 = vmatpush1.msra.mxu0 %v51
    %78 = vmatprep.subr.mxu0 0.0
    %79 = vmatpush1.msra.mxu0 %v50
    %80 = vmatprep.subr.mxu0 0.0
    %81 = vmatpush1.msra.mxu0 %v49
    %82 = vmatprep.subr.mxu0 0.0
    %83 = vmatpush1.msra.mxu0 %v48
    %84 = vmatprep.subr.mxu0 0.0
    %85 = vmatpush1.msra.mxu0 %v47
    %86 = vmatprep.subr.mxu0 0.0
    %87 = vmatpush1.msra.mxu0 %v46
    %88 = vmatprep.subr.mxu0 0.0
    %89 = vmatpush1.msra.mxu0 %v45
    %90 = vmatprep.subr.mxu0 0.0
    %91 = vmatpush1.msra.mxu0 %v44
    %92 = vmatprep.subr.mxu0 0.0
    %93 = vmatpush1.msra.mxu0 %v43
    %94 = vmatprep.subr.mxu0 0.0
    %95 = vmatpush1.msra.mxu0 %v42
    %96 = vmatprep.subr.mxu0 0.0
    %97 = vmatpush1.msra.mxu0 %v41
    %98 = vmatprep.subr.mxu0 0.0
    %99 = vmatpush1.msra.mxu0 %v40
    %100 = vmatprep.subr.mxu0 0.0
    %101 = vmatpush1.msra.mxu0 %v39
    %102 = vmatprep.subr.mxu0 0.0
    %103 = vmatpush1.msra.mxu0 %v38
    %104 = vmatprep.subr.mxu0 0.0
    %105 = vmatpush2.msra.mxu0 0.0
    %106 = vmatprep.subr.mxu0 0.0
    %107 = vmatpush2.msra.mxu0 0.0
    %108 = vmatprep.subr.mxu0 0.0
    %109 = vmatpush2.msra.mxu0 0.0
    %110 = vmatprep.subr.mxu0 0.0
    %111 = vmatpush2.msra.mxu0 0.0
    %112 = vmatprep.subr.mxu0 0.0
    %113 = vmatpush2.msra.mxu0 0.0
    %114 = vmatprep.subr.mxu0 0.0
    %115 = vmatpush2.msra.mxu0 0.0
    %116 = vmatprep.subr.mxu0 0.0
    %117 = vmatpush2.msra.mxu0 0.0
    %118 = vmatprep.subr.mxu0 0.0
    %119 = vmatpush2.msra.mxu0 0.0
    %120 = vmatprep.subr.mxu0 0.0
    %121 = vmatpush2.msra.mxu0 0.0
    %122 = vmatprep.subr.mxu0 0.0
    %123 = vmatpush2.msra.mxu0 0.0
    %124 = vmatprep.subr.mxu0 0.0
    %125 = vmatpush2.msra.mxu0 0.0
    %126 = vmatprep.subr.mxu0 0.0
    %127 = vmatpush2.msra.mxu0 0.0
    %128 = vmatprep.subr.mxu0 0.0
    %129 = vmatpush2.msra.mxu0 0.0
    %130 = vmatprep.subr.mxu0 0.0
    %131 = vmatpush2.msra.mxu0 0.0
    %132 = vmatprep.subr.mxu0 0.0
    %133 = vmatpush2.msra.mxu0 0.0
    %134 = vmatprep.subr.mxu0 0.0
    %135 = vmatpush2.msra.mxu0 0.0
    %136 = vmatprep.mubr.f32.mxu0 0.0
    %137 = vmatmul.mubr.f32.gmra.mxu0 %v71
    %v138 = vpop.f32.mrf.mxu0
    %v139 = vadd.f32 0.0, %v138
    %v140 = vpop.f32.mrf.mxu0
    %141 = vdwg.mxu0
    %v142 = vtanh.pop %v139
    %v143 = vlaneseq
    %v144 = vshrl.u32 %v143, 7
    %v145 = vsub.s32 0, %v144
    %v146 = vrot.slane %v70, %v145
    %147 = vmatprep.subr.mxu0 0.0
    %148 = vmatpush1.msra.mxu0 %v69
    %149 = vmatprep.subr.mxu0 0.0
    %150 = vmatpush1.msra.mxu0 %v68
    %151 = vmatprep.subr.mxu0 0.0
    %152 = vmatpush1.msra.mxu0 %v67
    %153 = vmatprep.subr.mxu0 0.0
    %154 = vmatpush1.msra.mxu0 %v66
    %155 = vmatprep.subr.mxu0 0.0
    %156 = vmatpush1.msra.mxu0 %v65
    %157 = vmatprep.subr.mxu0 0.0
    %158 = vmatpush1.msra.mxu0 %v64
    %159 = vmatprep.subr.mxu0 0.0
    %160 = vmatpush1.msra.mxu0 %v63
    %161 = vmatprep.subr.mxu0 0.0
    %162 = vmatpush1.msra.mxu0 %v62
    %163 = vmatprep.subr.mxu0 0.0
    %164 = vmatpush1.msra.mxu0 %v61
    %165 = vmatprep.subr.mxu0 0.0
    %166 = vmatpush1.msra.mxu0 %v60
    %167 = vmatprep.subr.mxu0 0.0
    %168 = vmatpush1.msra.mxu0 %v59
    %169 = vmatprep.subr.mxu0 0.0
    %170 = vmatpush1.msra.mxu0 %v58
    %171 = vmatprep.subr.mxu0 0.0
    %172 = vmatpush1.msra.mxu0 %v57
    %173 = vmatprep.subr.mxu0 0.0
    %174 = vmatpush1.msra.mxu0 %v56
    %175 = vmatprep.subr.mxu0 0.0
    %176 = vmatpush1.msra.mxu0 %v55
    %177 = vmatprep.subr.mxu0 0.0
    %178 = vmatpush1.msra.mxu0 %v54
    %179 = vmatprep.subr.mxu0 0.0
    %180 = vmatpush2.msra.mxu0 0.0
    %181 = vmatprep.subr.mxu0 0.0
    %182 = vmatpush2.msra.mxu0 0.0
    %183 = vmatprep.subr.mxu0 0.0
    %184 = vmatpush2.msra.mxu0 0.0
    %185 = vmatprep.subr.mxu0 0.0
    %186 = vmatpush2.msra.mxu0 0.0
    %187 = vmatprep.subr.mxu0 0.0
    %188 = vmatpush2.msra.mxu0 0.0
    %189 = vmatprep.subr.mxu0 0.0
    %190 = vmatpush2.msra.mxu0 0.0
    %191 = vmatprep.subr.mxu0 0.0
    %192 = vmatpush2.msra.mxu0 0.0
    %193 = vmatprep.subr.mxu0 0.0
    %194 = vmatpush2.msra.mxu0 0.0
    %195 = vmatprep.subr.mxu0 0.0
    %196 = vmatpush2.msra.mxu0 0.0
    %197 = vmatprep.subr.mxu0 0.0
    %198 = vmatpush2.msra.mxu0 0.0
    %199 = vmatprep.subr.mxu0 0.0
    %200 = vmatpush2.msra.mxu0 0.0
    %201 = vmatprep.subr.mxu0 0.0
    %202 = vmatpush2.msra.mxu0 0.0
    %203 = vmatprep.subr.mxu0 0.0
    %204 = vmatpush2.msra.mxu0 0.0
    %205 = vmatprep.subr.mxu0 0.0
    %206 = vmatpush2.msra.mxu0 0.0
    %207 = vmatprep.subr.mxu0 0.0
    %208 = vmatpush2.msra.mxu0 0.0
    %209 = vmatprep.subr.mxu0 0.0
    %210 = vmatpush2.msra.mxu0 0.0
    %211 = vmatprep.mubr.f32.mxu0 0.0
    %212 = vmatmul.mubr.f32.gmra.mxu0 %v142
    %v213 = vpop.f32.mrf.mxu0
    %v214 = vadd.f32 %v146, %v213
    %v215 = vpop.f32.mrf.mxu0
    %216 = vdwg.mxu0
    %217 = vst [vmem:[#allocation7] sm:$0xff] %v214
    // Predicated region
    $region18: #{tpu_custom_call.1} parent=1 // pred_check
      _
    $region19: #{tpu_custom_call.1} parent=1 // pred_check_branch
      %219 = sbr.rel (0) target = $region21
    $region20: #{tpu_custom_call.1} parent=1 // pred_region
      %s221 = ssub.s32 128, 128
      %222 = vsyncadd [#allocation4], %s221
      %s224 = sshll.u32 [#allocation7], 4
      %s225 = int_to_ptr.vmem [resolvable:$true] %s224
      %227 = dma.vmem_to_hbm [thread:$0]  %s225, 128, %s2, [#allocation4]
    $region21: #{tpu_custom_call.1} parent=1 // pred_fallthru
      _
    // Predicated region
    $region22: #{tpu_custom_call.1} parent=1 // pred_check
      _
    $region23: #{tpu_custom_call.1} parent=1 // pred_check_branch
      %229 = sbr.rel (0) target = $region25
    $region24: #{tpu_custom_call.1} parent=1 // pred_region
      %230 = dma.done [#allocation4], 128
    $region25: #{tpu_custom_call.1} parent=1 // pred_fallthru
      _
    %231 = vsyncpa [#allocation3], 1
    %232 = vsyncpa [#allocation6], 1
    %233 = vsyncpa [#allocation4], 1

</llo_original>
